<compile_context>
chip_gen: v6e
topology: v6e:2x2x1
jax: 0.10.0
libtpu: 0.0.40
codegen_flags: <defaults>
</compile_context>

<pallas_src>
import jax
import jax.numpy as jnp
from jax.experimental import pallas as pl
from jax.experimental.pallas import tpu as pltpu

EPS = 1e-5
LANES = 128


def _fold_bn(h, gamma, beta):
    """Training-mode BatchNorm1d folded to a per-feature scale/shift (f32)."""
    mu = jnp.mean(h, axis=0, keepdims=True)
    msq = jnp.mean(h * h, axis=0, keepdims=True)
    var = jnp.maximum(msq - mu * mu, 0.0)          # biased variance (PyTorch train)
    scale = gamma * jax.lax.rsqrt(var + EPS)
    shift = beta - mu * scale
    return h * scale + shift


def resblock_kernel(x_ref, w1s_ref, g1s_ref, be1s_ref,
                    w2_ref, g2_ref, be2_ref, out_ref):
    out_p = out_ref.shape[1]                       # padded feature width (static)

    # Fused first-layer + shortcut matmul: x @ [w1 | ws]  (bf16 in, f32 acc).
    hs = jnp.dot(x_ref[...], w1s_ref[...], preferred_element_type=jnp.float32)
    # One folded-BN pass over both halves.
    hs = _fold_bn(hs, g1s_ref[...], be1s_ref[...])

    h1 = jnp.maximum(hs[:, :out_p], 0.0)           # relu(bn1(linear1(x)))
    sc = hs[:, out_p:]                             # bn_s(linear_s(x))  (shortcut)

    # Second layer (bf16 operands on the MXU, f32 accumulate) + folded BN.
    h2 = jnp.dot(h1.astype(w2_ref.dtype), w2_ref[...],
                 preferred_element_type=jnp.float32)
    h2 = _fold_bn(h2, g2_ref[...], be2_ref[...])

    # Residual add + final ReLU (lane-dense, unmasked store).
    out_ref[...] = jnp.maximum(h2 + sc, 0.0).astype(out_ref.dtype)


def _pad_cols(a, width, fill=0.0):
    pad = width - a.shape[-1]
    if pad == 0:
        return a
    return jnp.pad(a, ((0, 0), (0, pad)), constant_values=fill)


def prepare_params(p, out_dim):
    """One-time prep: drop biases, pad features to 128 lanes, fuse [w1|ws], bf16 weights."""
    out_p = pl.cdiv(out_dim, LANES) * LANES
    pad = out_p - out_dim

    w1_p = _pad_cols(p["w1"], out_p)               # (in, out_p)
    ws_p = _pad_cols(p["ws"], out_p)               # (in, out_p)
    w1s = jnp.concatenate([w1_p, ws_p], axis=1).astype(jnp.bfloat16)   # (in, 2*out_p)

    g1s = jnp.concatenate([_pad_cols(p["g1"], out_p, 1.0),
                           _pad_cols(p["gs"], out_p, 1.0)], axis=1)    # (1, 2*out_p)
    be1s = jnp.concatenate([_pad_cols(p["be1"], out_p, 0.0),
                            _pad_cols(p["bes"], out_p, 0.0)], axis=1)  # (1, 2*out_p)

    w2_p = jnp.pad(p["w2"], ((0, pad), (0, pad))).astype(jnp.bfloat16)  # (out_p, out_p)
    g2_p = _pad_cols(p["g2"], out_p, 1.0)
    be2_p = _pad_cols(p["be2"], out_p, 0.0)

    return {"w1s": w1s, "g1s": g1s, "be1s": be1s,
            "w2": w2_p, "g2": g2_p, "be2": be2_p, "out_p": out_p}


def residual_block(x, prep, out_dim):
    """x: (B, in_dim) f32.  prep: output of prepare_params.  Returns (B, out_dim) f32."""
    B = x.shape[0]
    out_p = prep["out_p"]
    args = (x.astype(jnp.bfloat16),
            prep["w1s"], prep["g1s"], prep["be1s"],
            prep["w2"], prep["g2"], prep["be2"])
    vmem = pl.BlockSpec(memory_space=pltpu.MemorySpace.VMEM)
    out = pl.pallas_call(
        resblock_kernel,
        out_shape=jax.ShapeDtypeStruct((B, out_p), jnp.float32),
        in_specs=[vmem] * len(args),
        out_specs=vmem,
    )(*args)
    return out[:, :out_dim]                        # strip lane padding


def init_params(key, in_dim, out_dim):
    """PyTorch-like parameters (Linear weights stored transposed as (in, out))."""
    ks = jax.random.split(key, 6)
    s1 = 1.0 / jnp.sqrt(in_dim)
    s2 = 1.0 / jnp.sqrt(out_dim)
    return {
        "w1": jax.random.uniform(ks[0], (in_dim, out_dim), jnp.float32, -s1, s1),
        "b1": jax.random.uniform(ks[1], (1, out_dim), jnp.float32, -s1, s1),
        "g1": jnp.ones((1, out_dim), jnp.float32),
        "be1": jnp.zeros((1, out_dim), jnp.float32),
        "w2": jax.random.uniform(ks[2], (out_dim, out_dim), jnp.float32, -s2, s2),
        "b2": jax.random.uniform(ks[3], (1, out_dim), jnp.float32, -s2, s2),
        "g2": jnp.ones((1, out_dim), jnp.float32),
        "be2": jnp.zeros((1, out_dim), jnp.float32),
        "ws": jax.random.uniform(ks[4], (in_dim, out_dim), jnp.float32, -s1, s1),
        "bs": jax.random.uniform(ks[5], (1, out_dim), jnp.float32, -s1, s1),
        "gs": jnp.ones((1, out_dim), jnp.float32),
        "bes": jnp.zeros((1, out_dim), jnp.float32),
    }


def residual_block_ref(x, p):
    """Pure-JAX f32 reference matching the PyTorch forward (training-mode BN, biases included)."""
    def bn(h, g, b):
        mu = jnp.mean(h, axis=0, keepdims=True)
        var = jnp.mean((h - mu) ** 2, axis=0, keepdims=True)
        return g * (h - mu) / jnp.sqrt(var + EPS) + b

    sc = bn(x @ p["ws"] + p["bs"], p["gs"], p["bes"])
    h1 = jnp.maximum(bn(x @ p["w1"] + p["b1"], p["g1"], p["be1"]), 0.0)
    h2 = bn(h1 @ p["w2"] + p["b2"], p["g2"], p["be2"])
    return jnp.maximum(h2 + sc, 0.0)


if __name__ == "__main__":
    key = jax.random.PRNGKey(0)
    kx, kp = jax.random.split(key)

    B, in_dim, out_dim = 8, 32, 64
    x = jax.random.normal(kx, (B, in_dim), jnp.float32)
    params = init_params(kp, in_dim, out_dim)
    prep = prepare_params(params, out_dim)

    out = residual_block(x, prep, out_dim)
    jax.block_until_ready(out)

    ref = residual_block_ref(x, params)
    assert out.shape == (B, out_dim)
    max_err = float(jnp.max(jnp.abs(out - ref)))
    # bf16 MXU operands vs an f32 reference -> loose tolerance.
    assert jnp.allclose(out, ref, atol=5e-2, rtol=5e-2), (
        f"mismatch vs reference, max abs err {max_err}")

    print("KERNEL_OK")
</pallas_src>

<mosaic_0001>
module attributes {stable_mosaic.version = 11 : i64} {
  func.func @resblock_kernel(%arg0: memref<8x32xbf16, #tpu.memory_space<vmem>>, %arg1: memref<32x256xbf16, #tpu.memory_space<vmem>>, %arg2: memref<1x256xf32, #tpu.memory_space<vmem>>, %arg3: memref<1x256xf32, #tpu.memory_space<vmem>>, %arg4: memref<128x128xbf16, #tpu.memory_space<vmem>>, %arg5: memref<1x128xf32, #tpu.memory_space<vmem>>, %arg6: memref<1x128xf32, #tpu.memory_space<vmem>>, %arg7: memref<8x128xf32, #tpu.memory_space<vmem>>) attributes {dimension_semantics = [], scalar_prefetch = 0 : i64, scratch_operands = 0 : i64, tpu.core_type = #tpu.core_type<tc>} {
    %c0 = arith.constant 0 : index
    %c0_0 = arith.constant 0 : index
    %0 = vector.load %arg0[%c0, %c0_0] : memref<8x32xbf16, #tpu.memory_space<vmem>>, vector<8x32xbf16>
    %c0_1 = arith.constant 0 : index
    %c0_2 = arith.constant 0 : index
    %1 = vector.load %arg1[%c0_1, %c0_2] : memref<32x256xbf16, #tpu.memory_space<vmem>>, vector<32x256xbf16>
    %cst = arith.constant dense<0.000000e+00> : vector<8x256xf32>
    %2 = tpu.matmul %0, %1, %cst {dimension_numbers = #tpu.dot_dimension_numbers<[1], [0], [0], [1], [0, 0, 1, 1], [], []>} : vector<8x32xbf16>, vector<32x256xbf16>, vector<8x256xf32> -> vector<8x256xf32>
    %c0_3 = arith.constant 0 : index
    %c0_4 = arith.constant 0 : index
    %3 = vector.load %arg2[%c0_3, %c0_4] : memref<1x256xf32, #tpu.memory_space<vmem>>, vector<1x256xf32>
    %c0_5 = arith.constant 0 : index
    %c0_6 = arith.constant 0 : index
    %4 = vector.load %arg3[%c0_5, %c0_6] : memref<1x256xf32, #tpu.memory_space<vmem>>, vector<1x256xf32>
    %cst_7 = arith.constant dense<0.000000e+00> : vector<256xf32>
    %5 = vector.multi_reduction <add>, %2, %cst_7 [0] : vector<8x256xf32> to vector<256xf32>
    %6 = vector.shape_cast %5 : vector<256xf32> to vector<1x256xf32>
    %cst_8 = arith.constant 8.000000e+00 : f32
    %7 = vector.broadcast %cst_8 : f32 to vector<1x256xf32>
    %8 = arith.divf %6, %7 : vector<1x256xf32>
    %9 = arith.mulf %2, %2 : vector<8x256xf32>
    %cst_9 = arith.constant dense<0.000000e+00> : vector<256xf32>
    %10 = vector.multi_reduction <add>, %9, %cst_9 [0] : vector<8x256xf32> to vector<256xf32>
    %11 = vector.shape_cast %10 : vector<256xf32> to vector<1x256xf32>
    %cst_10 = arith.constant 8.000000e+00 : f32
    %12 = vector.broadcast %cst_10 : f32 to vector<1x256xf32>
    %13 = arith.divf %11, %12 : vector<1x256xf32>
    %14 = arith.mulf %8, %8 : vector<1x256xf32>
    %15 = arith.subf %13, %14 : vector<1x256xf32>
    %cst_11 = arith.constant 0.000000e+00 : f32
    %16 = vector.broadcast %cst_11 : f32 to vector<1x256xf32>
    %17 = arith.maximumf %15, %16 : vector<1x256xf32>
    %cst_12 = arith.constant 9.99999974E-6 : f32
    %18 = vector.broadcast %cst_12 : f32 to vector<1x256xf32>
    %19 = arith.addf %17, %18 : vector<1x256xf32>
    %20 = math.rsqrt %19 : vector<1x256xf32>
    %21 = arith.mulf %3, %20 : vector<1x256xf32>
    %22 = arith.mulf %8, %21 : vector<1x256xf32>
    %23 = arith.subf %4, %22 : vector<1x256xf32>
    %24 = vector.broadcast %21 : vector<1x256xf32> to vector<8x256xf32>
    %25 = arith.mulf %2, %24 : vector<8x256xf32>
    %26 = vector.broadcast %23 : vector<1x256xf32> to vector<8x256xf32>
    %27 = arith.addf %25, %26 : vector<8x256xf32>
    %28 = vector.extract_strided_slice %27 {offsets = [0, 0], sizes = [8, 128], strides = [1, 1]} : vector<8x256xf32> to vector<8x128xf32>
    %cst_13 = arith.constant 0.000000e+00 : f32
    %29 = vector.broadcast %cst_13 : f32 to vector<8x128xf32>
    %30 = arith.maximumf %28, %29 : vector<8x128xf32>
    %31 = vector.extract_strided_slice %27 {offsets = [0, 128], sizes = [8, 128], strides = [1, 1]} : vector<8x256xf32> to vector<8x128xf32>
    %32 = arith.truncf %30 : vector<8x128xf32> to vector<8x128xbf16>
    %c0_14 = arith.constant 0 : index
    %c0_15 = arith.constant 0 : index
    %33 = vector.load %arg4[%c0_14, %c0_15] : memref<128x128xbf16, #tpu.memory_space<vmem>>, vector<128x128xbf16>
    %cst_16 = arith.constant dense<0.000000e+00> : vector<8x128xf32>
    %34 = tpu.matmul %32, %33, %cst_16 {dimension_numbers = #tpu.dot_dimension_numbers<[1], [0], [0], [1], [0, 0, 1, 1], [], []>} : vector<8x128xbf16>, vector<128x128xbf16>, vector<8x128xf32> -> vector<8x128xf32>
    %c0_17 = arith.constant 0 : index
    %c0_18 = arith.constant 0 : index
    %35 = vector.load %arg5[%c0_17, %c0_18] : memref<1x128xf32, #tpu.memory_space<vmem>>, vector<1x128xf32>
    %c0_19 = arith.constant 0 : index
    %c0_20 = arith.constant 0 : index
    %36 = vector.load %arg6[%c0_19, %c0_20] : memref<1x128xf32, #tpu.memory_space<vmem>>, vector<1x128xf32>
    %cst_21 = arith.constant dense<0.000000e+00> : vector<128xf32>
    %37 = vector.multi_reduction <add>, %34, %cst_21 [0] : vector<8x128xf32> to vector<128xf32>
    %38 = vector.shape_cast %37 : vector<128xf32> to vector<1x128xf32>
    %cst_22 = arith.constant 8.000000e+00 : f32
    %39 = vector.broadcast %cst_22 : f32 to vector<1x128xf32>
    %40 = arith.divf %38, %39 : vector<1x128xf32>
    %41 = arith.mulf %34, %34 : vector<8x128xf32>
    %cst_23 = arith.constant dense<0.000000e+00> : vector<128xf32>
    %42 = vector.multi_reduction <add>, %41, %cst_23 [0] : vector<8x128xf32> to vector<128xf32>
    %43 = vector.shape_cast %42 : vector<128xf32> to vector<1x128xf32>
    %cst_24 = arith.constant 8.000000e+00 : f32
    %44 = vector.broadcast %cst_24 : f32 to vector<1x128xf32>
    %45 = arith.divf %43, %44 : vector<1x128xf32>
    %46 = arith.mulf %40, %40 : vector<1x128xf32>
    %47 = arith.subf %45, %46 : vector<1x128xf32>
    %cst_25 = arith.constant 0.000000e+00 : f32
    %48 = vector.broadcast %cst_25 : f32 to vector<1x128xf32>
    %49 = arith.maximumf %47, %48 : vector<1x128xf32>
    %cst_26 = arith.constant 9.99999974E-6 : f32
    %50 = vector.broadcast %cst_26 : f32 to vector<1x128xf32>
    %51 = arith.addf %49, %50 : vector<1x128xf32>
    %52 = math.rsqrt %51 : vector<1x128xf32>
    %53 = arith.mulf %35, %52 : vector<1x128xf32>
    %54 = arith.mulf %40, %53 : vector<1x128xf32>
    %55 = arith.subf %36, %54 : vector<1x128xf32>
    %56 = vector.broadcast %53 : vector<1x128xf32> to vector<8x128xf32>
    %57 = arith.mulf %34, %56 : vector<8x128xf32>
    %58 = vector.broadcast %55 : vector<1x128xf32> to vector<8x128xf32>
    %59 = arith.addf %57, %58 : vector<8x128xf32>
    %60 = arith.addf %59, %31 : vector<8x128xf32>
    %cst_27 = arith.constant 0.000000e+00 : f32
    %61 = vector.broadcast %cst_27 : f32 to vector<8x128xf32>
    %62 = arith.maximumf %60, %61 : vector<8x128xf32>
    %c0_28 = arith.constant 0 : index
    %c0_29 = arith.constant 0 : index
    %63 = vector.load %arg7[%c0_28, %c0_29] : memref<8x128xf32, #tpu.memory_space<vmem>>, vector<8x128xf32>
    tpu.vector_store %arg7[%c0_28, %c0_29], %62 {strides = array<i32>} : memref<8x128xf32, #tpu.memory_space<vmem>>, vector<8x128xf32>,
    return
  }
}

</mosaic_0001>

<llo_original>
// kernel: tpu_custom_call.1
$region0: #{tpu_custom_call.1}
  #allocation0 [shape = 'u32[]', space=smem, size = 0x4, offset = 0x4, fixed_abs, tag = 'smem constant byte address 0x4 - core index']
  #allocation1 [shape = 'u32[144,128]{1,0:T(1,128)}', space=vmem, size = 0x12000, scoped, tag = 'internal scratch']
  %s0 = inlined_call_operand.hbm [shape: bf16[8,32], index: 0, kind: input, shape index: {}]
  %s1 = inlined_call_operand.hbm [shape: bf16[32,256], index: 1, kind: input, shape index: {}]
  %s2 = inlined_call_operand.vmem [shape: f32[1,256], index: 2, kind: input, shape index: {}]
  %s3 = inlined_call_operand.vmem [shape: f32[1,256], index: 3, kind: input, shape index: {}]
  %s4 = inlined_call_operand.hbm [shape: bf16[128,128], index: 4, kind: input, shape index: {}]
  %s5 = inlined_call_operand.vmem [shape: f32[1,128], index: 5, kind: input, shape index: {}]
  %s6 = inlined_call_operand.vmem [shape: f32[1,128], index: 6, kind: input, shape index: {}]
  %s7 = inlined_call_operand.hbm [shape: f32[8,128], index: 7, kind: output, shape index: {}]
  %s8 = sld [smem:[#allocation0]]
  $region50: #{tpu_custom_call.1} parent=0
    _
  %s10 = ssub.s32 1, %s8
  %s11 = scalar_select 0, %s10, %s8
  $region1: #{tpu_custom_call.1} parent=0
    #allocation2 [shape = 'u8[2048]{0}', space=vmem, size = 0x800, scoped, tag = 'input window, operand 0, single buffered']
    #allocation3 [shape = 's32[1]{0}', space=sflag, size = 0x4, scoped, tag = 'scoped memory for tpu_custom_call.1']
    #allocation4 [shape = 's32[1]{0}', space=sflag, size = 0x4, scoped, tag = 'scoped memory for tpu_custom_call.1']
    #allocation5 [shape = 'u8[16384]{0}', space=vmem, size = 0x4000, scoped, tag = 'input window, operand 1, single buffered']
    #allocation6 [shape = 's32[1]{0}', space=sflag, size = 0x4, scoped, tag = 'scoped memory for tpu_custom_call.1']
    #allocation7 [shape = 'u8[32768]{0}', space=vmem, size = 0x8000, scoped, tag = 'input window, operand 4, single buffered']
    #allocation8 [shape = 'u8[4096]{0}', space=vmem, size = 0x1000, scoped, tag = 'output window, operand 0, single buffered']
    %12 = vsyncpa [#allocation3], 0
    %13 = vsyncpa [#allocation6], 0
    %14 = vsyncpa [#allocation4], 0
    // Predicated region
    $region2: #{tpu_custom_call.1} parent=1 // pred_check
      _
    $region3: #{tpu_custom_call.1} parent=1 // pred_check_branch
      %16 = sbr.rel (0) target = $region5
    $region4: #{tpu_custom_call.1} parent=1 // pred_region
      %s18 = ssub.s32 64, 64
      %19 = vsyncadd [#allocation3], %s18
      %s21 = sshll.u32 [#allocation2], 4
      %s22 = int_to_ptr.vmem [resolvable:$true] %s21
      %24 = dma.hbm_to_vmem [thread:$0]  %s0, 64, %s22, [#allocation3]
    $region5: #{tpu_custom_call.1} parent=1 // pred_fallthru
      _
    // Predicated region
    $region6: #{tpu_custom_call.1} parent=1 // pred_check
      _
    $region7: #{tpu_custom_call.1} parent=1 // pred_check_branch
      %26 = sbr.rel (0) target = $region9
    $region8: #{tpu_custom_call.1} parent=1 // pred_region
      %s28 = ssub.s32 512, 512
      %29 = vsyncadd [#allocation6], %s28
      %s30 = sshll.u32 [#allocation5], 4
      %s31 = int_to_ptr.vmem [resolvable:$true] %s30
      %36 = dma.hbm_to_vmem [thread:$0]  %s1, 512, %s31, [#allocation6], 128, 128, 8
    $region9: #{tpu_custom_call.1} parent=1 // pred_fallthru
      _
    // Predicated region
    $region10: #{tpu_custom_call.1} parent=1 // pred_check
      _
    $region11: #{tpu_custom_call.1} parent=1 // pred_check_branch
      %38 = sbr.rel (0) target = $region13
    $region12: #{tpu_custom_call.1} parent=1 // pred_region
      _
    $region13: #{tpu_custom_call.1} parent=1 // pred_fallthru
      _
    // Predicated region
    $region14: #{tpu_custom_call.1} parent=1 // pred_check
      _
    $region15: #{tpu_custom_call.1} parent=1 // pred_check_branch
      %40 = sbr.rel (0) target = $region17
    $region16: #{tpu_custom_call.1} parent=1 // pred_region
      _
    $region17: #{tpu_custom_call.1} parent=1 // pred_fallthru
      _
    // Predicated region
    $region18: #{tpu_custom_call.1} parent=1 // pred_check
      _
    $region19: #{tpu_custom_call.1} parent=1 // pred_check_branch
      %42 = sbr.rel (0) target = $region21
    $region20: #{tpu_custom_call.1} parent=1 // pred_region
      %s44 = ssub.s32 1024, 1024
      %45 = vsyncadd [#allocation6], %s44
      %s46 = sshll.u32 [#allocation7], 4
      %s47 = int_to_ptr.vmem [resolvable:$true] %s46
      %52 = dma.hbm_to_vmem [thread:$0]  %s4, 1024, %s47, [#allocation6], 64, 64, 4
    $region21: #{tpu_custom_call.1} parent=1 // pred_fallthru
      _
    // Predicated region
    $region22: #{tpu_custom_call.1} parent=1 // pred_check
      _
    $region23: #{tpu_custom_call.1} parent=1 // pred_check_branch
      %54 = sbr.rel (0) target = $region25
    $region24: #{tpu_custom_call.1} parent=1 // pred_region
      _
    $region25: #{tpu_custom_call.1} parent=1 // pred_fallthru
      _
    // Predicated region
    $region26: #{tpu_custom_call.1} parent=1 // pred_check
      _
    $region27: #{tpu_custom_call.1} parent=1 // pred_check_branch
      %56 = sbr.rel (0) target = $region29
    $region28: #{tpu_custom_call.1} parent=1 // pred_region
      _
    $region29: #{tpu_custom_call.1} parent=1 // pred_fallthru
      _
    // Predicated region
    $region30: #{tpu_custom_call.1} parent=1 // pred_check
      _
    $region31: #{tpu_custom_call.1} parent=1 // pred_check_branch
      %58 = sbr.rel (0) target = $region33
    $region32: #{tpu_custom_call.1} parent=1 // pred_region
      %59 = dma.done [#allocation3], 64
    $region33: #{tpu_custom_call.1} parent=1 // pred_fallthru
      _
    // Predicated region
    $region34: #{tpu_custom_call.1} parent=1 // pred_check
      _
    $region35: #{tpu_custom_call.1} parent=1 // pred_check_branch
      %61 = sbr.rel (0) target = $region37
    $region36: #{tpu_custom_call.1} parent=1 // pred_region
      %62 = dma.done [#allocation6], 512
    $region37: #{tpu_custom_call.1} parent=1 // pred_fallthru
      _
    // Predicated region
    $region38: #{tpu_custom_call.1} parent=1 // pred_check
      _
    $region39: #{tpu_custom_call.1} parent=1 // pred_check_branch
      %64 = sbr.rel (0) target = $region41
    $region40: #{tpu_custom_call.1} parent=1 // pred_region
      %65 = dma.done [#allocation6], 1024
    $region41: #{tpu_custom_call.1} parent=1 // pred_fallthru
      _
    %v67 = vld [vmem:[#allocation2] sm:$0xf]
    %v68 = vld [vmem:[#allocation5] sm:$0xff]
    %v69 = vld [vmem:[#allocation5 + $0x8] sm:$0xff]
    %v70 = vld [vmem:[#allocation5 + $0x10] sm:$0xff]
    %v71 = vld [vmem:[#allocation5 + $0x18] sm:$0xff]
    %v76 = vunpack.c.l.b16 %v68
    %v77 = vunpack.c.h.b16 %v68
    %v78 = vunpack.c.l.b16 %v69
    %v79 = vunpack.c.h.b16 %v69
    %v80 = vunpack.c.l.b16 %v70
    %v81 = vunpack.c.h.b16 %v70
    %v82 = vunpack.c.l.b16 %v71
    %v83 = vunpack.c.h.b16 %v71
    %v84 = vpack.c.b16 %v78, %v76
    %v85 = vpack.c.b16 %v79, %v77
    %v86 = vpack.c.b16 %v82, %v80
    %v87 = vpack.c.b16 %v83, %v81
    %vm92 = vcmask 261120
    %v94 = vsel %vm92, %v67, 0
    %96 = vmatprep.subr.bf16.mxu0 0
    %97 = vmatpush1.bf16.msra.mxu0 0
    %98 = vmatprep.subr.bf16.mxu0 0
    %99 = vmatpush1.bf16.msra.mxu0 0
    %100 = vmatprep.subr.bf16.mxu0 0
    %101 = vmatpush1.bf16.msra.mxu0 0
    %102 = vmatprep.subr.bf16.mxu0 0
    %103 = vmatpush1.bf16.msra.mxu0 0
    %104 = vmatprep.subr.bf16.mxu0 0
    %105 = vmatpush1.bf16.msra.mxu0 0
    %106 = vmatprep.subr.bf16.mxu0 0
    %107 = vmatpush1.bf16.msra.mxu0 0
    %108 = vmatprep.subr.bf16.mxu0 %v87
    %109 = vmatpush1.bf16.msra.mxu0 %v86
    %110 = vmatprep.subr.bf16.mxu0 %v85
    %111 = vmatpush1.bf16.msra.mxu0 %v84
    %112 = vmatprep.subr.bf16.mxu0 0
    %113 = vmatpush2.bf16.msra.mxu0 0
    %114 = vmatprep.subr.bf16.mxu0 0
    %115 = vmatpush2.bf16.msra.mxu0 0
    %116 = vmatprep.subr.bf16.mxu0 0
    %117 = vmatpush2.bf16.msra.mxu0 0
    %118 = vmatprep.subr.bf16.mxu0 0
    %119 = vmatpush2.bf16.msra.mxu0 0
    %120 = vmatprep.subr.bf16.mxu0 0
    %121 = vmatpush2.bf16.msra.mxu0 0
    %122 = vmatprep.subr.bf16.mxu0 0
    %123 = vmatpush2.bf16.msra.mxu0 0
    %124 = vmatprep.subr.bf16.mxu0 0
    %125 = vmatpush2.bf16.msra.mxu0 0
    %126 = vmatprep.subr.bf16.mxu0 0
    %127 = vmatpush2.bf16.msra.mxu0 0
    %128 = vmatprep.mubr.bf16.mxu0 0
    %129 = vmatmul.mubr.bf16.gmra.mxu0 %v94
    %v130 = vpop.f32.mrf.mxu0
    %v131 = vadd.f32 0.0, %v130
    %v132 = vpop.f32.mrf.mxu0
    %v133 = vadd.f32 0.0, %v132
    %v134 = vpop.f32.mrf.mxu0
    %v135 = vpop.f32.mrf.mxu0
    %136 = vdwg.mxu0
    %v137 = vld [vmem:[%s2] sm:$0x3]
    %v138 = vld [vmem:[%s3] sm:$0x3]
    %v139 = vrot.slane %v131, 4
    %v140 = vadd.f32 %v131, %v139
    %v141 = vrot.slane %v140, 2
    %v142 = vadd.f32 %v140, %v141
    %v143 = vrot.slane %v142, 1
    %v144 = vadd.f32 %v142, %v143
    %v145 = vrot.slane %v133, 4
    %v146 = vadd.f32 %v133, %v145
    %v147 = vrot.slane %v146, 2
    %v148 = vadd.f32 %v146, %v147
    %v149 = vrot.slane %v148, 1
    %v150 = vadd.f32 %v148, %v149
    %v151 = vrcp.pop 8.0
    %v152 = vmul.f32 %v144, %v151
    %v153 = vmul.f32 %v150, %v151
    %v154 = vmul.f32 %v131, %v131
    %v155 = vmul.f32 %v133, %v133
    %v156 = vrot.slane %v154, 4
    %v157 = vadd.f32 %v154, %v156
    %v158 = vrot.slane %v157, 2
    %v159 = vadd.f32 %v157, %v158
    %v160 = vrot.slane %v159, 1
    %v161 = vadd.f32 %v159, %v160
    %v162 = vrot.slane %v155, 4
    %v163 = vadd.f32 %v155, %v162
    %v164 = vrot.slane %v163, 2
    %v165 = vadd.f32 %v163, %v164
    %v166 = vrot.slane %v165, 1
    %v167 = vadd.f32 %v165, %v166
    %v168 = vmul.f32 %v161, %v151
    %v169 = vmul.f32 %v167, %v151
    %v170 = vmul.f32 %v152, %v152
    %v171 = vmul.f32 %v153, %v153
    %v172 = vsub.f32 %v168, %v170
    %v173 = vsub.f32 %v169, %v171
    %v174 = vmax.f32 %v172, 0.0
    %v175 = vmax.f32 %v173, 0.0
    %v176 = vadd.f32 %v174, 1e-05
    %v177 = vadd.f32 %v175, 1e-05
    %v178 = vrsqrt.pop %v176
    %v179 = vrsqrt.pop %v177
    %v182 = vcombine.low %v178, %v179
    %v184 = vunpack.c.l.s4 1966171168
    %v185 = vunpack.c.0.s8 %v184
    %v186 = vlaneseq
    %v187 = vshrl.u32 %v186, 7
    %v188 = vsub.s32 %v185, %v187
    %v189 = vrot.slane %v182, %v188
    %v191 = vunpack.c.l.s4 1966171168
    %v192 = vunpack.c.0.s8 %v191
    %v193 = vlaneseq
    %v194 = vshrl.u32 %v193, 7
    %v195 = vsub.s32 %v192, %v194
    %v196 = vrot.slane %v189, %v195
    %v198 = vmul.f32 %v137, %v196
    %v200 = vlaneseq
    %v201 = vshrl.u32 %v200, 7
    %v202 = vsub.s32 0, %v201
    %v203 = vrot.slane %v198, %v202
    %v204 = vlaneseq
    %v205 = vshrl.u32 %v204, 7
    %v206 = vsub.s32 1, %v205
    %v207 = vrot.slane %v198, %v206
    %v210 = vmul.f32 %v152, %v203
    %v211 = vmul.f32 %v153, %v207
    %v214 = vcombine.low %v210, %v211
    %v216 = vunpack.c.l.s4 1966171168
    %v217 = vunpack.c.0.s8 %v216
    %v218 = vlaneseq
    %v219 = vshrl.u32 %v218, 7
    %v220 = vsub.s32 %v217, %v219
    %v221 = vrot.slane %v214, %v220
    %v223 = vunpack.c.l.s4 1966171168
    %v224 = vunpack.c.0.s8 %v223
    %v225 = vlaneseq
    %v226 = vshrl.u32 %v225, 7
    %v227 = vsub.s32 %v224, %v226
    %v228 = vrot.slane %v221, %v227
    %v230 = vsub.f32 %v138, %v228
    %v231 = vmul.f32 %v131, %v203
    %v232 = vmul.f32 %v133, %v207
    %v234 = vlaneseq
    %v235 = vshrl.u32 %v234, 7
    %v236 = vsub.s32 0, %v235
    %v237 = vrot.slane %v230, %v236
    %v238 = vlaneseq
    %v239 = vshrl.u32 %v238, 7
    %v240 = vsub.s32 1, %v239
    %v241 = vrot.slane %v230, %v240
    %v244 = vadd.f32 %v231, %v237
    %v245 = vadd.f32 %v232, %v241
    %v246 = vmax.f32 %v244, 0.0
    %v247 = vpack.c.bf16 %v246, %v246
    %v248 = vld [vmem:[#allocation7] sm:$0xf]
    %v249 = vld [vmem:[#allocation7 + $0x4] sm:$0xf]
    %v250 = vld [vmem:[#allocation7 + $0x8] sm:$0xf]
    %v251 = vld [vmem:[#allocation7 + $0xc] sm:$0xf]
    %v252 = vld [vmem:[#allocation7 + $0x10] sm:$0xf]
    %v253 = vld [vmem:[#allocation7 + $0x14] sm:$0xf]
    %v254 = vld [vmem:[#allocation7 + $0x18] sm:$0xf]
    %v255 = vld [vmem:[#allocation7 + $0x1c] sm:$0xf]
    %v256 = vld [vmem:[#allocation7 + $0x20] sm:$0xf]
    %v257 = vld [vmem:[#allocation7 + $0x24] sm:$0xf]
    %v258 = vld [vmem:[#allocation7 + $0x28] sm:$0xf]
    %v259 = vld [vmem:[#allocation7 + $0x2c] sm:$0xf]
    %v260 = vld [vmem:[#allocation7 + $0x30] sm:$0xf]
    %v261 = vld [vmem:[#allocation7 + $0x34] sm:$0xf]
    %v262 = vld [vmem:[#allocation7 + $0x38] sm:$0xf]
    %v263 = vld [vmem:[#allocation7 + $0x3c] sm:$0xf]
    %v280 = vunpack.c.l.b16 %v248
    %v281 = vunpack.c.l.b16 %v249
    %v282 = vunpack.c.l.b16 %v250
    %v283 = vunpack.c.l.b16 %v251
    %v284 = vunpack.c.l.b16 %v252
    %v285 = vunpack.c.l.b16 %v253
    %v286 = vunpack.c.l.b16 %v254
    %v287 = vunpack.c.l.b16 %v255
    %v288 = vunpack.c.l.b16 %v256
    %v289 = vunpack.c.l.b16 %v257
    %v290 = vunpack.c.l.b16 %v258
    %v291 = vunpack.c.l.b16 %v259
    %v292 = vunpack.c.l.b16 %v260
    %v293 = vunpack.c.l.b16 %v261
    %v294 = vunpack.c.l.b16 %v262
    %v295 = vunpack.c.l.b16 %v263
    %v296 = vpack.c.b16 %v281, %v280
    %v297 = vpack.c.b16 %v283, %v282
    %v298 = vpack.c.b16 %v285, %v284
    %v299 = vpack.c.b16 %v287, %v286
    %v300 = vpack.c.b16 %v289, %v288
    %v301 = vpack.c.b16 %v291, %v290
    %v302 = vpack.c.b16 %v293, %v292
    %v303 = vpack.c.b16 %v295, %v294
    %312 = vmatprep.subr.bf16.mxu0 0
    %313 = vmatpush1.bf16.msra.mxu0 %v303
    %314 = vmatprep.subr.bf16.mxu0 0
    %315 = vmatpush1.bf16.msra.mxu0 %v302
    %316 = vmatprep.subr.bf16.mxu0 0
    %317 = vmatpush1.bf16.msra.mxu0 %v301
    %318 = vmatprep.subr.bf16.mxu0 0
    %319 = vmatpush1.bf16.msra.mxu0 %v300
    %320 = vmatprep.subr.bf16.mxu0 0
    %321 = vmatpush1.bf16.msra.mxu0 %v299
    %322 = vmatprep.subr.bf16.mxu0 0
    %323 = vmatpush1.bf16.msra.mxu0 %v298
    %324 = vmatprep.subr.bf16.mxu0 0
    %325 = vmatpush1.bf16.msra.mxu0 %v297
    %326 = vmatprep.subr.bf16.mxu0 0
    %327 = vmatpush1.bf16.msra.mxu0 %v296
    %328 = vmatprep.subr.bf16.mxu0 0
    %329 = vmatpush2.bf16.msra.mxu0 0
    %330 = vmatprep.subr.bf16.mxu0 0
    %331 = vmatpush2.bf16.msra.mxu0 0
    %332 = vmatprep.subr.bf16.mxu0 0
    %333 = vmatpush2.bf16.msra.mxu0 0
    %334 = vmatprep.subr.bf16.mxu0 0
    %335 = vmatpush2.bf16.msra.mxu0 0
    %336 = vmatprep.subr.bf16.mxu0 0
    %337 = vmatpush2.bf16.msra.mxu0 0
    %338 = vmatprep.subr.bf16.mxu0 0
    %339 = vmatpush2.bf16.msra.mxu0 0
    %340 = vmatprep.subr.bf16.mxu0 0
    %341 = vmatpush2.bf16.msra.mxu0 0
    %342 = vmatprep.subr.bf16.mxu0 0
    %343 = vmatpush2.bf16.msra.mxu0 0
    %344 = vmatprep.mubr.bf16.mxu0 0
    %345 = vmatmul.mubr.bf16.gmra.mxu0 %v247
    %v346 = vpop.f32.mrf.mxu0
    %v347 = vadd.f32 0.0, %v346
    %v348 = vpop.f32.mrf.mxu0
    %v349 = vpop.f32.mrf.mxu0
    %v350 = vpop.f32.mrf.mxu0
    %351 = vdwg.mxu0
    %v352 = vld [vmem:[%s5] sm:$0x1]
    %v353 = vld [vmem:[%s6] sm:$0x1]
    %v354 = vrot.slane %v347, 4
    %v355 = vadd.f32 %v347, %v354
    %v356 = vrot.slane %v355, 2
    %v357 = vadd.f32 %v355, %v356
    %v358 = vrot.slane %v357, 1
    %v359 = vadd.f32 %v357, %v358
    %v360 = vmul.f32 %v359, %v151
    %v361 = vmul.f32 %v347, %v347
    %v362 = vrot.slane %v361, 4
    %v363 = vadd.f32 %v361, %v362
    %v364 = vrot.slane %v363, 2
    %v365 = vadd.f32 %v363, %v364
    %v366 = vrot.slane %v365, 1
    %v367 = vadd.f32 %v365, %v366
    %v368 = vmul.f32 %v367, %v151
    %v369 = vmul.f32 %v360, %v360
    %v370 = vsub.f32 %v368, %v369
    %v371 = vmax.f32 %v370, 0.0
    %v372 = vadd.f32 %v371, 1e-05
    %v373 = vrsqrt.pop %v372
    %v374 = vmul.f32 %v352, %v373
    %v375 = vmul.f32 %v360, %v374
    %v376 = vsub.f32 %v353, %v375
    %v378 = vlaneseq
    %v379 = vshrl.u32 %v378, 7
    %v380 = vsub.s32 0, %v379
    %v381 = vrot.slane %v374, %v380
    %v383 = vmul.f32 %v347, %v381
    %v385 = vlaneseq
    %v386 = vshrl.u32 %v385, 7
    %v387 = vsub.s32 0, %v386
    %v388 = vrot.slane %v376, %v387
    %v390 = vadd.f32 %v383, %v388
    %v391 = vadd.f32 %v390, %v245
    %v392 = vmax.f32 %v391, 0.0
    %393 = vst [vmem:[#allocation8] sm:$0xff] %v392
    // Predicated region
    $region42: #{tpu_custom_call.1} parent=1 // pred_check
      _
    $region43: #{tpu_custom_call.1} parent=1 // pred_check_branch
      %395 = sbr.rel (0) target = $region45
    $region44: #{tpu_custom_call.1} parent=1 // pred_region
      %s397 = ssub.s32 128, 128
      %398 = vsyncadd [#allocation4], %s397
      %s400 = sshll.u32 [#allocation8], 4
      %s401 = int_to_ptr.vmem [resolvable:$true] %s400
      %403 = dma.vmem_to_hbm [thread:$0]  %s401, 128, %s7, [#allocation4]
    $region45: #{tpu_custom_call.1} parent=1 // pred_fallthru
      _
    // Predicated region
    $region46: #{tpu_custom_call.1} parent=1 // pred_check
      _
    $region47: #{tpu_custom_call.1} parent=1 // pred_check_branch
      %405 = sbr.rel (0) target = $region49
    $region48: #{tpu_custom_call.1} parent=1 // pred_region
      %406 = dma.done [#allocation4], 128
    $region49: #{tpu_custom_call.1} parent=1 // pred_fallthru
      _
    %407 = vsyncpa [#allocation3], 1
    %408 = vsyncpa [#allocation6], 1
    %409 = vsyncpa [#allocation4], 1

</llo_original>
